<compile_context>
chip_gen: v5e
topology: v5e:2x2
jax: 0.10.0
libtpu: 0.0.40
codegen_flags: <defaults>
</compile_context>

<pallas_src>
import jax
import jax.numpy as jnp
import numpy as np
from jax.experimental import pallas as pl
from jax.experimental.pallas import tpu as pltpu

# ----------------------------- configuration -------------------------------
S = 8            # number of state rows fed to Actor.forward (demo size)
E = 8            # input_dim == num_heads (required by the module's head MLPs)
NUM_HEADS = 8
HIDDEN = 32      # transformer feed-forward hidden dim
MLP_H = 32       # hidden width inside mean/log_std heads (hard-coded 32)
ACTION = 4       # action_dim
LN_EPS = 1e-5

PAD = 128        # lane width of the packed slabs (full vreg lane width)
MAX_TILE = 4096  # max batch columns per grid step

# weight-slab row offsets (all multiples of 8 -> clean sublane-aligned slices)
ROW_WA = 0                   # (E, E)             folded attention + residual
ROW_W1 = ROW_WA + E          # (HIDDEN, E)        ff layer 1
ROW_W2 = ROW_W1 + HIDDEN     # (E, HIDDEN)        ff layer 2
ROW_H1 = ROW_W2 + E          # (2*MLP_H, E)       merged heads layer 1 (LN2 folded in)
ROW_H2 = ROW_H1 + 2 * MLP_H  # (2*MLP_H, 2*MLP_H) merged heads layer 2 (block-diag)
ROW_H3 = ROW_H2 + 2 * MLP_H  # (2*ACTION, 2*MLP_H) merged heads layer 3 (block-diag)
W_ROWS = ROW_H3 + 2 * ACTION  # = 184

# bias-slab row offsets (each param stored as a column vector in lane 0)
OFF_B_ATTN = 0
OFF_G1 = OFF_B_ATTN + E
OFF_BE1 = OFF_G1 + E
OFF_B1 = OFF_BE1 + E
OFF_B2 = OFF_B1 + HIDDEN
OFF_HB1 = OFF_B2 + E
OFF_HB2 = OFF_HB1 + 2 * MLP_H
OFF_HB3 = OFF_HB2 + 2 * MLP_H
B_ROWS = OFF_HB3 + 2 * ACTION  # = 200


# ------------------------------- the kernel --------------------------------
def actor_kernel(x_ref, w_ref, b_ref, o_ref):
    f32 = jnp.float32

    def W(r0, rows, cols):                       # static, sublane-aligned slice
        return w_ref[r0:r0 + rows, 0:cols]

    def B(r0, rows):                             # (rows, 1) bias / LN column
        return b_ref[r0:r0 + rows, 0:1]

    def ln(h, g=None, b=None):                   # LayerNorm over the feature axis
        mu = jnp.mean(h, axis=0, keepdims=True)  # features live on 8 sublanes
        var = jnp.mean((h - mu) ** 2, axis=0, keepdims=True)
        y = (h - mu) * jax.lax.rsqrt(var + LN_EPS)
        if g is not None:
            y = y * g + b
        return y

    x = x_ref[...]                                               # (E, ts), lane-dense

    # attention (L == 1 -> softmax == 1) + residual, folded into ONE matmul
    h = jnp.dot(W(ROW_WA, E, E), x, preferred_element_type=f32) + B(OFF_B_ATTN, E)
    h = ln(h, B(OFF_G1, E), B(OFF_BE1, E))

    # transformer feed-forward + residual + LN2 (gamma2/beta2 folded into heads)
    ff = jnp.maximum(
        jnp.dot(W(ROW_W1, HIDDEN, E), h, preferred_element_type=f32) + B(OFF_B1, HIDDEN),
        0.0)
    ff = jnp.dot(W(ROW_W2, E, HIDDEN), ff, preferred_element_type=f32) + B(OFF_B2, E)
    h = ln(h + ff)

    # merged mean / log_std heads (block-diagonal weights, exact zero blocks)
    z = jnp.maximum(
        jnp.dot(W(ROW_H1, 2 * MLP_H, E), h, preferred_element_type=f32)
        + B(OFF_HB1, 2 * MLP_H), 0.0)
    z = jnp.maximum(
        jnp.dot(W(ROW_H2, 2 * MLP_H, 2 * MLP_H), z, preferred_element_type=f32)
        + B(OFF_HB2, 2 * MLP_H), 0.0)
    out = (jnp.dot(W(ROW_H3, 2 * ACTION, 2 * MLP_H), z, preferred_element_type=f32)
           + B(OFF_HB3, 2 * ACTION))                             # (2*ACTION, ts)

    # rows [0:A] = mean (raw), rows [A:2A] = std = exp(clip(log_std, -20, 2))
    std = jnp.exp(jnp.clip(out, -20.0, 2.0))
    row = jax.lax.broadcasted_iota(jnp.int32, out.shape, 0)
    o_ref[...] = jnp.where(row >= ACTION, std, out)              # lane-dense store


# ------------------------------- the wrapper --------------------------------
def _pick_tile(s, col_tile=None):
    """Pick a lane-axis (batch) tile: large, multiple of 128, grid >= 2 if possible."""
    if col_tile is not None:
        assert s % col_tile == 0, "batch size must be divisible by the tile"
        return col_tile
    if s <= 128 or s % 128 != 0:
        return s                       # single block (block dim == full array dim)
    best = None
    ts = 128
    while ts <= min(s // 2, MAX_TILE):
        if s % ts == 0:
            best = ts
        ts += 128
    return best if best is not None else s


def actor_forward(x, p, *, col_tile=None, return_packed=False):
    """Actor forward.  x: (S, E) float32.  Returns (mean, std), each (S, ACTION).

    With return_packed=True, returns the raw feature-major (2*ACTION, S) slab
    (rows 0:ACTION = mean, rows ACTION: = std) and skips the wrapper-side
    transpose/slice passes entirely.
    """
    s, e = x.shape
    assert e == E
    ts = _pick_tile(s, col_tile)
    wslab, bslab = p["wslab"], p["bslab"]

    out_t = pl.pallas_call(
        actor_kernel,
        out_shape=jax.ShapeDtypeStruct((2 * ACTION, s), jnp.float32),
        grid_spec=pltpu.PrefetchScalarGridSpec(
            num_scalar_prefetch=0,
            grid=(s // ts,),
            in_specs=[
                pl.BlockSpec((E, ts), lambda i: (0, i)),        # activations stream
                pl.BlockSpec(wslab.shape, lambda i: (0, 0)),    # weights resident
                pl.BlockSpec(bslab.shape, lambda i: (0, 0)),    # biases resident
            ],
            out_specs=pl.BlockSpec((2 * ACTION, ts), lambda i: (0, i)),
        ),
        compiler_params=pltpu.CompilerParams(dimension_semantics=("parallel",)),
    )(x.T, wslab, bslab)                                        # feed feature-major x^T

    if return_packed:
        return out_t
    return out_t[:ACTION, :].T, out_t[ACTION:, :].T


# --------------------------- parameter construction -------------------------
def _pad_lanes(a, cols=PAD):
    return jnp.pad(a, ((0, 0), (0, cols - a.shape[1])))


def _bias_col(v, cols=PAD):
    out = jnp.zeros((v.shape[0], cols), jnp.float32)
    return out.at[:, 0].set(v)


def _block_diag(a, b):
    z1 = jnp.zeros((a.shape[0], b.shape[1]), jnp.float32)
    z2 = jnp.zeros((b.shape[0], a.shape[1]), jnp.float32)
    return jnp.concatenate(
        [jnp.concatenate([a, z1], axis=1), jnp.concatenate([z2, b], axis=1)], axis=0)


def make_params(key):
    ks = jax.random.split(key, 24)
    k = iter(ks)
    std = 0.1

    def w(rng, shape):
        return std * jax.random.normal(rng, shape, jnp.float32)

    # MultiheadAttention packed in_proj (3E, E) + bias, out_proj (E, E) + bias
    in_proj_w = w(next(k), (3 * E, E))
    in_proj_b = w(next(k), (3 * E,))
    wq, wk, wv = in_proj_w[:E], in_proj_w[E:2 * E], in_proj_w[2 * E:]
    bq, bk, bv = in_proj_b[:E], in_proj_b[E:2 * E], in_proj_b[2 * E:]
    wo, bo = w(next(k), (E, E)), w(next(k), (E,))

    # layer norms (randomized away from 1/0 so the LN folds are actually exercised)
    g1 = 1.0 + 0.1 * jax.random.normal(next(k), (E,), jnp.float32)
    be1 = 0.1 * jax.random.normal(next(k), (E,), jnp.float32)
    g2 = 1.0 + 0.1 * jax.random.normal(next(k), (E,), jnp.float32)
    be2 = 0.1 * jax.random.normal(next(k), (E,), jnp.float32)

    # transformer feed-forward (PyTorch Linear weights are (out, in))
    w1, b1 = w(next(k), (HIDDEN, E)), w(next(k), (HIDDEN,))
    w2, b2 = w(next(k), (E, HIDDEN)), w(next(k), (E,))

    # mean head
    m1, mb1 = w(next(k), (MLP_H, NUM_HEADS)), w(next(k), (MLP_H,))
    m2, mb2 = w(next(k), (MLP_H, MLP_H)), w(next(k), (MLP_H,))
    m3, mb3 = w(next(k), (ACTION, MLP_H)), w(next(k), (ACTION,))

    # log_std head
    l1, lb1 = w(next(k), (MLP_H, NUM_HEADS)), w(next(k), (MLP_H,))
    l2, lb2 = w(next(k), (MLP_H, MLP_H)), w(next(k), (MLP_H,))
    l3, lb3 = w(next(k), (ACTION, MLP_H)), w(next(k), (ACTION,))

    # ---- offline folding (feature-major / transposed convention) -------------
    # attention with L==1 plus residual: h = (I + Wo Wv) x^T + (Wo bv + bo)
    w_attn = jnp.eye(E, dtype=jnp.float32) + wo @ wv            # (E, E) = (out, in)
    b_attn = wo @ bv + bo                                       # (E,)

    # merged heads: layer1 concat, layers 2/3 block-diagonal (exact zeros)
    h1 = jnp.concatenate([m1, l1], axis=0)                      # (64, E)
    hb1 = jnp.concatenate([mb1, lb1])                           # (64,)
    # fold LayerNorm2 gamma/beta into heads layer 1 (post-LN2 feeds only the heads)
    h1 = h1 * g2[None, :]
    hb1 = hb1 + h1 @ jnp.zeros_like(be2) + jnp.concatenate([m1, l1], axis=0) @ (g2 * 0 + be2) * 0 \
        if False else jnp.concatenate([mb1, lb1]) + (jnp.concatenate([m1, l1], axis=0) @ be2)
    h2 = _block_diag(m2, l2)                                    # (64, 64)
    hb2 = jnp.concatenate([mb2, lb2])                           # (64,)
    h3 = _block_diag(m3, l3)                                    # (8, 64)
    hb3 = jnp.concatenate([mb3, lb3])                           # (8,)

    # ---- pack into two 128-lane slabs ----------------------------------------
    wslab = jnp.concatenate(
        [_pad_lanes(w_attn), _pad_lanes(w1), _pad_lanes(w2),
         _pad_lanes(h1), _pad_lanes(h2), _pad_lanes(h3)], axis=0)
    assert wslab.shape == (W_ROWS, PAD)

    bslab = jnp.concatenate(
        [_bias_col(v) for v in
         (b_attn, g1, be1, b1, b2, hb1, hb2, hb3)], axis=0)
    assert bslab.shape == (B_ROWS, PAD)

    # raw (unfolded) params for the pure-JAX reference
    ref = dict(wq=wq, bq=bq, wk=wk, bk=bk, wv=wv, bv=bv, wo=wo, bo=bo,
               g1=g1, be1=be1, g2=g2, be2=be2,
               w1=w1, b1=b1, w2=w2, b2=b2,
               m1=m1, mb1=mb1, m2=m2, mb2=mb2, m3=m3, mb3=mb3,
               l1=l1, lb1=lb1, l2=l2, lb2=lb2, l3=l3, lb3=lb3)
    return dict(wslab=wslab, bslab=bslab, ref=ref)


# ------------------------------ pure-JAX reference ---------------------------
def actor_reference(x, p):
    """Mirrors the PyTorch forward exactly, incl. the full MHA q/k/softmax path."""
    r = p["ref"]
    s, e = x.shape
    head_dim = e // NUM_HEADS
    q = x @ r["wq"].T + r["bq"]
    kk = x @ r["wk"].T + r["bk"]
    v = x @ r["wv"].T + r["bv"]
    qh = q.reshape(s, NUM_HEADS, head_dim)
    kh = kk.reshape(s, NUM_HEADS, head_dim)
    vh = v.reshape(s, NUM_HEADS, head_dim)
    scores = jnp.sum(qh * kh, axis=-1) / np.sqrt(head_dim)   # L == 1: one key
    wts = jax.nn.softmax(scores[..., None], axis=-1)         # == 1.0 exactly
    attn = (wts * vh).reshape(s, e) @ r["wo"].T + r["bo"]

    def ln(h, g, b):
        mu = jnp.mean(h, axis=-1, keepdims=True)
        var = jnp.mean((h - mu) ** 2, axis=-1, keepdims=True)
        return (h - mu) / jnp.sqrt(var + LN_EPS) * g + b

    h = ln(x + attn, r["g1"], r["be1"])
    ff = jnp.maximum(h @ r["w1"].T + r["b1"], 0.0) @ r["w2"].T + r["b2"]
    h = ln(h + ff, r["g2"], r["be2"])

    m = jnp.maximum(h @ r["m1"].T + r["mb1"], 0.0)
    m = jnp.maximum(m @ r["m2"].T + r["mb2"], 0.0)
    mean = m @ r["m3"].T + r["mb3"]

    t = jnp.maximum(h @ r["l1"].T + r["lb1"], 0.0)
    t = jnp.maximum(t @ r["l2"].T + r["lb2"], 0.0)
    log_std = jnp.clip(t @ r["l3"].T + r["lb3"], -20.0, 2.0)
    return mean, jnp.exp(log_std)


# ----------------------------------- main ------------------------------------
if __name__ == "__main__":
    key = jax.random.PRNGKey(0)
    kx, kp, kb = jax.random.split(key, 3)
    params = make_params(kp)

    # small shape matching the module (8 state rows, input_dim = num_heads = 8)
    x = jax.random.normal(kx, (S, E), jnp.float32)
    mean, std_out = actor_forward(x, params)
    jax.block_until_ready((mean, std_out))
    mean_ref, std_ref = actor_reference(x, params)
    np.testing.assert_allclose(np.asarray(mean), np.asarray(mean_ref), rtol=1e-4, atol=1e-5)
    np.testing.assert_allclose(np.asarray(std_out), np.asarray(std_ref), rtol=1e-4, atol=1e-5)
    assert mean.shape == (S, ACTION) and std_out.shape == (S, ACTION)

    # larger batch exercising the tiled, multi-grid-step lane-dense path
    xb = jax.random.normal(kb, (512, E), jnp.float32)
    mean_b, std_b = actor_forward(xb, params)          # ts=256 -> grid=(2,), parallel
    jax.block_until_ready((mean_b, std_b))
    mean_br, std_br = actor_reference(xb, params)
    np.testing.assert_allclose(np.asarray(mean_b), np.asarray(mean_br), rtol=1e-4, atol=1e-5)
    np.testing.assert_allclose(np.asarray(std_b), np.asarray(std_br), rtol=1e-4, atol=1e-5)

    # TODO(synk): sample_action (torch.distributions Normal rsample/log_prob/entropy)
    # is outside forward() and intentionally not implemented in the kernel.
    print("KERNEL_OK")
</pallas_src>

<mosaic_0001>
module attributes {stable_mosaic.version = 11 : i64} {
  func.func @actor_kernel(%arg0: i32, %arg1: memref<8x8xf32, #tpu.memory_space<vmem>>, %arg2: memref<184x128xf32, #tpu.memory_space<vmem>>, %arg3: memref<200x128xf32, #tpu.memory_space<vmem>>, %arg4: memref<8x8xf32, #tpu.memory_space<vmem>>) attributes {dimension_semantics = [#tpu.dimension_semantics<parallel>], iteration_bounds = array<i64: 1>, scalar_prefetch = 0 : i64, scratch_operands = 0 : i64, tpu.core_type = #tpu.core_type<tc>, window_params = [{transform_indices = @transform_0, window_bounds = array<i64: 8, 8>}, {pipeline_mode = #tpu.pipeline_mode<synchronous>, transform_indices = @transform_1, window_bounds = array<i64: 184, 128>}, {pipeline_mode = #tpu.pipeline_mode<synchronous>, transform_indices = @transform_2, window_bounds = array<i64: 200, 128>}, {transform_indices = @transform_3, window_bounds = array<i64: 8, 8>}]} {
    %c0 = arith.constant 0 : index
    %c0_0 = arith.constant 0 : index
    %0 = vector.load %arg1[%c0, %c0_0] : memref<8x8xf32, #tpu.memory_space<vmem>>, vector<8x8xf32>
    %c0_1 = arith.constant 0 : index
    %c0_2 = arith.constant 0 : index
    %1 = vector.load %arg2[%c0_1, %c0_2] : memref<184x128xf32, #tpu.memory_space<vmem>>, vector<8x8xf32>
    %cst = arith.constant dense<0.000000e+00> : vector<8x8xf32>
    %2 = tpu.matmul %1, %0, %cst {dimension_numbers = #tpu.dot_dimension_numbers<[1], [0], [0], [1], [0, 0, 1, 1], [], []>} : vector<8x8xf32>, vector<8x8xf32>, vector<8x8xf32> -> vector<8x8xf32>
    %c0_3 = arith.constant 0 : index
    %c0_4 = arith.constant 0 : index
    %3 = vector.load %arg3[%c0_3, %c0_4] : memref<200x128xf32, #tpu.memory_space<vmem>>, vector<8x1xf32>
    %4 = vector.broadcast %3 : vector<8x1xf32> to vector<8x8xf32>
    %5 = arith.addf %2, %4 : vector<8x8xf32>
    %c8 = arith.constant 8 : index
    %c0_5 = arith.constant 0 : index
    %6 = vector.load %arg3[%c8, %c0_5] : memref<200x128xf32, #tpu.memory_space<vmem>>, vector<8x1xf32>
    %c16 = arith.constant 16 : index
    %c0_6 = arith.constant 0 : index
    %7 = vector.load %arg3[%c16, %c0_6] : memref<200x128xf32, #tpu.memory_space<vmem>>, vector<8x1xf32>
    %cst_7 = arith.constant dense<0.000000e+00> : vector<8xf32>
    %8 = vector.multi_reduction <add>, %5, %cst_7 [0] : vector<8x8xf32> to vector<8xf32>
    %9 = vector.shape_cast %8 : vector<8xf32> to vector<1x8xf32>
    %cst_8 = arith.constant 8.000000e+00 : f32
    %10 = vector.broadcast %cst_8 : f32 to vector<1x8xf32>
    %11 = arith.divf %9, %10 : vector<1x8xf32>
    %12 = vector.broadcast %11 : vector<1x8xf32> to vector<8x8xf32>
    %13 = arith.subf %5, %12 : vector<8x8xf32>
    %14 = arith.mulf %13, %13 : vector<8x8xf32>
    %cst_9 = arith.constant dense<0.000000e+00> : vector<8xf32>
    %15 = vector.multi_reduction <add>, %14, %cst_9 [0] : vector<8x8xf32> to vector<8xf32>
    %16 = vector.shape_cast %15 : vector<8xf32> to vector<1x8xf32>
    %cst_10 = arith.constant 8.000000e+00 : f32
    %17 = vector.broadcast %cst_10 : f32 to vector<1x8xf32>
    %18 = arith.divf %16, %17 : vector<1x8xf32>
    %19 = vector.broadcast %11 : vector<1x8xf32> to vector<8x8xf32>
    %20 = arith.subf %5, %19 : vector<8x8xf32>
    %cst_11 = arith.constant 9.99999974E-6 : f32
    %21 = vector.broadcast %cst_11 : f32 to vector<1x8xf32>
    %22 = arith.addf %18, %21 : vector<1x8xf32>
    %23 = math.rsqrt %22 : vector<1x8xf32>
    %24 = vector.broadcast %23 : vector<1x8xf32> to vector<8x8xf32>
    %25 = arith.mulf %20, %24 : vector<8x8xf32>
    %26 = vector.broadcast %6 : vector<8x1xf32> to vector<8x8xf32>
    %27 = arith.mulf %25, %26 : vector<8x8xf32>
    %28 = vector.broadcast %7 : vector<8x1xf32> to vector<8x8xf32>
    %29 = arith.addf %27, %28 : vector<8x8xf32>
    %c8_12 = arith.constant 8 : index
    %c0_13 = arith.constant 0 : index
    %30 = vector.load %arg2[%c8_12, %c0_13] : memref<184x128xf32, #tpu.memory_space<vmem>>, vector<32x8xf32>
    %cst_14 = arith.constant dense<0.000000e+00> : vector<32x8xf32>
    %31 = tpu.matmul %30, %29, %cst_14 {dimension_numbers = #tpu.dot_dimension_numbers<[1], [0], [0], [1], [0, 0, 1, 1], [], []>} : vector<32x8xf32>, vector<8x8xf32>, vector<32x8xf32> -> vector<32x8xf32>
    %c24 = arith.constant 24 : index
    %c0_15 = arith.constant 0 : index
    %32 = vector.load %arg3[%c24, %c0_15] : memref<200x128xf32, #tpu.memory_space<vmem>>, vector<32x1xf32>
    %33 = vector.broadcast %32 : vector<32x1xf32> to vector<32x8xf32>
    %34 = arith.addf %31, %33 : vector<32x8xf32>
    %cst_16 = arith.constant 0.000000e+00 : f32
    %35 = vector.broadcast %cst_16 : f32 to vector<32x8xf32>
    %36 = arith.maximumf %34, %35 : vector<32x8xf32>
    %c40 = arith.constant 40 : index
    %c0_17 = arith.constant 0 : index
    %37 = vector.load %arg2[%c40, %c0_17] : memref<184x128xf32, #tpu.memory_space<vmem>>, vector<8x32xf32>
    %cst_18 = arith.constant dense<0.000000e+00> : vector<8x8xf32>
    %38 = tpu.matmul %37, %36, %cst_18 {dimension_numbers = #tpu.dot_dimension_numbers<[1], [0], [0], [1], [0, 0, 1, 1], [], []>} : vector<8x32xf32>, vector<32x8xf32>, vector<8x8xf32> -> vector<8x8xf32>
    %c56 = arith.constant 56 : index
    %c0_19 = arith.constant 0 : index
    %39 = vector.load %arg3[%c56, %c0_19] : memref<200x128xf32, #tpu.memory_space<vmem>>, vector<8x1xf32>
    %40 = vector.broadcast %39 : vector<8x1xf32> to vector<8x8xf32>
    %41 = arith.addf %38, %40 : vector<8x8xf32>
    %42 = arith.addf %29, %41 : vector<8x8xf32>
    %cst_20 = arith.constant dense<0.000000e+00> : vector<8xf32>
    %43 = vector.multi_reduction <add>, %42, %cst_20 [0] : vector<8x8xf32> to vector<8xf32>
    %44 = vector.shape_cast %43 : vector<8xf32> to vector<1x8xf32>
    %cst_21 = arith.constant 8.000000e+00 : f32
    %45 = vector.broadcast %cst_21 : f32 to vector<1x8xf32>
    %46 = arith.divf %44, %45 : vector<1x8xf32>
    %47 = vector.broadcast %46 : vector<1x8xf32> to vector<8x8xf32>
    %48 = arith.subf %42, %47 : vector<8x8xf32>
    %49 = arith.mulf %48, %48 : vector<8x8xf32>
    %cst_22 = arith.constant dense<0.000000e+00> : vector<8xf32>
    %50 = vector.multi_reduction <add>, %49, %cst_22 [0] : vector<8x8xf32> to vector<8xf32>
    %51 = vector.shape_cast %50 : vector<8xf32> to vector<1x8xf32>
    %cst_23 = arith.constant 8.000000e+00 : f32
    %52 = vector.broadcast %cst_23 : f32 to vector<1x8xf32>
    %53 = arith.divf %51, %52 : vector<1x8xf32>
    %54 = vector.broadcast %46 : vector<1x8xf32> to vector<8x8xf32>
    %55 = arith.subf %42, %54 : vector<8x8xf32>
    %cst_24 = arith.constant 9.99999974E-6 : f32
    %56 = vector.broadcast %cst_24 : f32 to vector<1x8xf32>
    %57 = arith.addf %53, %56 : vector<1x8xf32>
    %58 = math.rsqrt %57 : vector<1x8xf32>
    %59 = vector.broadcast %58 : vector<1x8xf32> to vector<8x8xf32>
    %60 = arith.mulf %55, %59 : vector<8x8xf32>
    %c48 = arith.constant 48 : index
    %c0_25 = arith.constant 0 : index
    %61 = vector.load %arg2[%c48, %c0_25] : memref<184x128xf32, #tpu.memory_space<vmem>>, vector<64x8xf32>
    %cst_26 = arith.constant dense<0.000000e+00> : vector<64x8xf32>
    %62 = tpu.matmul %61, %60, %cst_26 {dimension_numbers = #tpu.dot_dimension_numbers<[1], [0], [0], [1], [0, 0, 1, 1], [], []>} : vector<64x8xf32>, vector<8x8xf32>, vector<64x8xf32> -> vector<64x8xf32>
    %c64 = arith.constant 64 : index
    %c0_27 = arith.constant 0 : index
    %63 = vector.load %arg3[%c64, %c0_27] : memref<200x128xf32, #tpu.memory_space<vmem>>, vector<64x1xf32>
    %64 = vector.broadcast %63 : vector<64x1xf32> to vector<64x8xf32>
    %65 = arith.addf %62, %64 : vector<64x8xf32>
    %cst_28 = arith.constant 0.000000e+00 : f32
    %66 = vector.broadcast %cst_28 : f32 to vector<64x8xf32>
    %67 = arith.maximumf %65, %66 : vector<64x8xf32>
    %c112 = arith.constant 112 : index
    %c0_29 = arith.constant 0 : index
    %68 = vector.load %arg2[%c112, %c0_29] : memref<184x128xf32, #tpu.memory_space<vmem>>, vector<64x64xf32>
    %cst_30 = arith.constant dense<0.000000e+00> : vector<64x8xf32>
    %69 = tpu.matmul %68, %67, %cst_30 {dimension_numbers = #tpu.dot_dimension_numbers<[1], [0], [0], [1], [0, 0, 1, 1], [], []>} : vector<64x64xf32>, vector<64x8xf32>, vector<64x8xf32> -> vector<64x8xf32>
    %c128 = arith.constant 128 : index
    %c0_31 = arith.constant 0 : index
    %70 = vector.load %arg3[%c128, %c0_31] : memref<200x128xf32, #tpu.memory_space<vmem>>, vector<64x1xf32>
    %71 = vector.broadcast %70 : vector<64x1xf32> to vector<64x8xf32>
    %72 = arith.addf %69, %71 : vector<64x8xf32>
    %cst_32 = arith.constant 0.000000e+00 : f32
    %73 = vector.broadcast %cst_32 : f32 to vector<64x8xf32>
    %74 = arith.maximumf %72, %73 : vector<64x8xf32>
    %c176 = arith.constant 176 : index
    %c0_33 = arith.constant 0 : index
    %75 = vector.load %arg2[%c176, %c0_33] : memref<184x128xf32, #tpu.memory_space<vmem>>, vector<8x64xf32>
    %cst_34 = arith.constant dense<0.000000e+00> : vector<8x8xf32>
    %76 = tpu.matmul %75, %74, %cst_34 {dimension_numbers = #tpu.dot_dimension_numbers<[1], [0], [0], [1], [0, 0, 1, 1], [], []>} : vector<8x64xf32>, vector<64x8xf32>, vector<8x8xf32> -> vector<8x8xf32>
    %c192 = arith.constant 192 : index
    %c0_35 = arith.constant 0 : index
    %77 = vector.load %arg3[%c192, %c0_35] : memref<200x128xf32, #tpu.memory_space<vmem>>, vector<8x1xf32>
    %78 = vector.broadcast %77 : vector<8x1xf32> to vector<8x8xf32>
    %79 = arith.addf %76, %78 : vector<8x8xf32>
    %cst_36 = arith.constant -2.000000e+01 : f32
    %cst_37 = arith.constant 2.000000e+00 : f32
    %80 = vector.broadcast %cst_36 : f32 to vector<8x8xf32>
    %81 = arith.maximumf %80, %79 : vector<8x8xf32>
    %82 = vector.broadcast %cst_37 : f32 to vector<8x8xf32>
    %83 = arith.minimumf %82, %81 : vector<8x8xf32>
    %84 = math.exp %83 : vector<8x8xf32>
    %85 = tpu.iota {dimensions = array<i32: 0>} : vector<8x8xi32>
    %c4_i32 = arith.constant 4 : i32
    %86 = vector.broadcast %c4_i32 : i32 to vector<8x8xi32>
    %87 = arith.cmpi sge, %85, %86 : vector<8x8xi32>
    %88 = arith.select %87, %84, %79 : vector<8x8xi1>, vector<8x8xf32>
    %c0_38 = arith.constant 0 : index
    %c0_39 = arith.constant 0 : index
    %89 = vector.load %arg4[%c0_38, %c0_39] : memref<8x8xf32, #tpu.memory_space<vmem>>, vector<8x8xf32>
    tpu.vector_store %arg4[%c0_38, %c0_39], %88 {strides = array<i32>} : memref<8x8xf32, #tpu.memory_space<vmem>>, vector<8x8xf32>,
    return
  }
  func.func @transform_0(%arg0: i32) -> (i32, i32) {
    %c0_i32 = arith.constant 0 : i32
    %c0_i32_0 = arith.constant 0 : i32
    return %c0_i32, %arg0 : i32, i32
  }
  func.func @transform_1(%arg0: i32) -> (i32, i32) {
    %c0_i32 = arith.constant 0 : i32
    %c0_i32_0 = arith.constant 0 : i32
    %c0_i32_1 = arith.constant 0 : i32
    return %c0_i32, %c0_i32_0 : i32, i32
  }
  func.func @transform_2(%arg0: i32) -> (i32, i32) {
    %c0_i32 = arith.constant 0 : i32
    %c0_i32_0 = arith.constant 0 : i32
    %c0_i32_1 = arith.constant 0 : i32
    return %c0_i32, %c0_i32_0 : i32, i32
  }
  func.func @transform_3(%arg0: i32) -> (i32, i32) {
    %c0_i32 = arith.constant 0 : i32
    %c0_i32_0 = arith.constant 0 : i32
    return %c0_i32, %arg0 : i32, i32
  }
}

</mosaic_0001>

<llo_original>
// kernel: tpu_custom_call.1
$region0: #{tpu_custom_call.1}
  #allocation0 [shape = 'u32[]', space=smem, size = 0x4, offset = 0x4, fixed_abs, tag = 'smem constant byte address 0x4 - core index']
  #allocation1 [shape = 'u32[72,128]{1,0:T(1,128)}', space=vmem, size = 0x9000, scoped, tag = 'internal scratch']
  %s0 = inlined_call_operand.hbm [shape: f32[8,8], index: 0, kind: input, shape index: {}]
  %s1 = inlined_call_operand.hbm [shape: f32[184,128], index: 1, kind: input, shape index: {}]
  %s2 = inlined_call_operand.hbm [shape: f32[200,128], index: 2, kind: input, shape index: {}]
  %s3 = inlined_call_operand.hbm [shape: f32[8,8], index: 3, kind: output, shape index: {}]
  %s4 = sld [smem:[#allocation0]]
  $region34: #{tpu_custom_call.1} parent=0
    _
  %s6 = ssub.s32 1, %s4
  %s7 = scalar_select 0, %s6, %s4
  $region1: #{tpu_custom_call.1} parent=0
    #allocation2 [shape = 'u8[4096]{0}', space=vmem, size = 0x1000, scoped, tag = 'input window, operand 0, single buffered']
    #allocation3 [shape = 's32[1]{0}', space=sflag, size = 0x4, scoped, tag = 'scoped memory for tpu_custom_call.1']
    #allocation4 [shape = 's32[1]{0}', space=sflag, size = 0x4, scoped, tag = 'scoped memory for tpu_custom_call.1']
    #allocation5 [shape = 'u8[94208]{0}', space=vmem, size = 0x17000, scoped, tag = 'input window, operand 1, single buffered']
    #allocation6 [shape = 's32[1]{0}', space=sflag, size = 0x4, scoped, tag = 'scoped memory for tpu_custom_call.1']
    #allocation7 [shape = 'u8[102400]{0}', space=vmem, size = 0x19000, scoped, tag = 'input window, operand 2, single buffered']
    #allocation8 [shape = 'u8[4096]{0}', space=vmem, size = 0x1000, scoped, tag = 'output window, operand 0, single buffered']
    %8 = vsyncpa [#allocation3], 0
    %9 = vsyncpa [#allocation6], 0
    %10 = vsyncpa [#allocation4], 0
    // Predicated region
    $region2: #{tpu_custom_call.1} parent=1 // pred_check
      _
    $region3: #{tpu_custom_call.1} parent=1 // pred_check_branch
      %12 = sbr.rel (0) target = $region5
    $region4: #{tpu_custom_call.1} parent=1 // pred_region
      %14 = vsyncadd [#allocation3], 0
      %s16 = sshll.u32 %s0, 4
      %s17 = int_to_ptr.hbm [resolvable:$true] %s16
      %s18 = sshll.u32 [#allocation2], 4
      %s19 = int_to_ptr.vmem [resolvable:$true] %s18
      %21 = dma.hbm_to_vmem [thread:$0]  %s17, 128, %s19, [#allocation3]
    $region5: #{tpu_custom_call.1} parent=1 // pred_fallthru
      _
    // Predicated region
    $region6: #{tpu_custom_call.1} parent=1 // pred_check
      _
    $region7: #{tpu_custom_call.1} parent=1 // pred_check_branch
      %23 = sbr.rel (0) target = $region9
    $region8: #{tpu_custom_call.1} parent=1 // pred_region
      %25 = vsyncadd [#allocation6], 0
      %s26 = sshll.u32 %s1, 4
      %s27 = int_to_ptr.hbm [resolvable:$true] %s26
      %s28 = sshll.u32 [#allocation5], 4
      %s29 = int_to_ptr.vmem [resolvable:$true] %s28
      %34 = dma.hbm_to_vmem [thread:$0]  %s27, 2944, %s29, [#allocation6], 128, 128, 8
    $region9: #{tpu_custom_call.1} parent=1 // pred_fallthru
      _
    // Predicated region
    $region10: #{tpu_custom_call.1} parent=1 // pred_check
      _
    $region11: #{tpu_custom_call.1} parent=1 // pred_check_branch
      %36 = sbr.rel (0) target = $region13
    $region12: #{tpu_custom_call.1} parent=1 // pred_region
      %38 = vsyncadd [#allocation6], 0
      %s39 = sshll.u32 %s2, 4
      %s40 = int_to_ptr.hbm [resolvable:$true] %s39
      %s41 = sshll.u32 [#allocation7], 4
      %s42 = int_to_ptr.vmem [resolvable:$true] %s41
      %47 = dma.hbm_to_vmem [thread:$0]  %s40, 3200, %s42, [#allocation6], 128, 128, 8
    $region13: #{tpu_custom_call.1} parent=1 // pred_fallthru
      _
    // Predicated region
    $region14: #{tpu_custom_call.1} parent=1 // pred_check
      _
    $region15: #{tpu_custom_call.1} parent=1 // pred_check_branch
      %49 = sbr.rel (0) target = $region17
    $region16: #{tpu_custom_call.1} parent=1 // pred_region
      %51 = dma.done [#allocation3], 128
    $region17: #{tpu_custom_call.1} parent=1 // pred_fallthru
      _
    // Predicated region
    $region18: #{tpu_custom_call.1} parent=1 // pred_check
      _
    $region19: #{tpu_custom_call.1} parent=1 // pred_check_branch
      %53 = sbr.rel (0) target = $region21
    $region20: #{tpu_custom_call.1} parent=1 // pred_region
      %55 = dma.done [#allocation6], 2944
    $region21: #{tpu_custom_call.1} parent=1 // pred_fallthru
      _
    // Predicated region
    $region22: #{tpu_custom_call.1} parent=1 // pred_check
      _
    $region23: #{tpu_custom_call.1} parent=1 // pred_check_branch
      %57 = sbr.rel (0) target = $region25
    $region24: #{tpu_custom_call.1} parent=1 // pred_region
      %59 = dma.done [#allocation6], 3200
    $region25: #{tpu_custom_call.1} parent=1 // pred_fallthru
      _
    %v60 = vld [vmem:[#allocation2] sm:$0xff]
    %v61 = vld [vmem:[#allocation5] sm:$0xff]
    %v62 = vld [vmem:[#allocation7] sm:$0xff]
    %64 = vset.pattern.permute.xlu0 0
    %65 = vperm.xlu0 %64, %v62
    %v66 = vpop.permute.xlu0 %65
    %vm68 = vcmask 64512
    %v70 = vsel %vm68, %v61, 0
    %72 = vmatpush.msra.mxu0 0.0
    %73 = vmatpush.msra.mxu0 0.0
    %74 = vmatpush.msra.mxu0 0.0
    %75 = vmatpush.msra.mxu0 0.0
    %76 = vmatpush.msra.mxu0 0.0
    %77 = vmatpush.msra.mxu0 0.0
    %78 = vmatpush.msra.mxu0 0.0
    %79 = vmatpush.msra.mxu0 0.0
    %80 = vmatpush.msra.mxu0 0.0
    %81 = vmatpush.msra.mxu0 0.0
    %82 = vmatpush.msra.mxu0 0.0
    %83 = vmatpush.msra.mxu0 0.0
    %84 = vmatpush.msra.mxu0 0.0
    %85 = vmatpush.msra.mxu0 0.0
    %86 = vmatpush.msra.mxu0 0.0
    %87 = vmatpush.msra.mxu0 %v60
    %88 = vmatmul.f32.gmra.mxu0 %v70
    %v89 = vpop.f32.mrf.mxu0
    %v90 = vadd.f32 %v66, %v89
    %91 = vdwg.mxu0
    %v92 = vld [vmem:[#allocation7 + $0x8] sm:$0xff]
    %v93 = vld [vmem:[#allocation7 + $0x10] sm:$0xff]
    %v94 = vsel %vm68, %v90, 0.0
    %v95 = vrot.slane %v94, 4
    %v96 = vadd.f32 %v94, %v95
    %v97 = vrot.slane %v96, 2
    %v98 = vadd.f32 %v96, %v97
    %v99 = vrot.slane %v98, 1
    %v100 = vadd.f32 %v98, %v99
    %v101 = vrcp.pop 8.0
    %v102 = vmul.f32 8.0, %v101
    %v103 = vsub.f32 1.0, %v102
    %v104 = vmul.f32 %v101, %v103
    %v105 = vadd.f32 %v101, %v104
    %vm106 = vweird.f32 %v101
    %v107 = vsel %vm106, %v101, %v105
    %v108 = vmul.f32 %v100, %v107
    %v109 = vsub.f32 %v90, %v108
    %v110 = vmul.f32 %v109, %v109
    %v111 = vsel %vm68, %v110, 0.0
    %v112 = vrot.slane %v111, 4
    %v113 = vadd.f32 %v111, %v112
    %v114 = vrot.slane %v113, 2
    %v115 = vadd.f32 %v113, %v114
    %v116 = vrot.slane %v115, 1
    %v117 = vadd.f32 %v115, %v116
    %v118 = vmul.f32 %v117, %v107
    %v119 = vadd.f32 %v118, 1e-05
    %v120 = vrsqrt.pop %v119
    %v121 = vmul.f32 %v120, %v119
    %v122 = vmul.f32 %v121, %v120
    %v123 = vmul.f32 0.5, %v122
    %v124 = vsub.f32 1.5, %v123
    %v125 = vmul.f32 %v120, %v124
    %vm126 = vweird.f32 %v119
    %vm127 = vweird.f32 %v120
    %vm128 = vmor %vm126, %vm127
    %v129 = vsel %vm128, %v120, %v125
    %v130 = vmul.f32 %v109, %v129
    %132 = vset.pattern.permute.xlu0 0
    %133 = vperm.xlu0 %132, %v92
    %v134 = vpop.permute.xlu0 %133
    %v136 = vmul.f32 %v130, %v134
    %138 = vset.pattern.permute.xlu0 0
    %139 = vperm.xlu0 %138, %v93
    %v140 = vpop.permute.xlu0 %139
    %v142 = vadd.f32 %v136, %v140
    %v143 = vld [vmem:[#allocation5 + $0x8] sm:$0xff]
    %v144 = vld [vmem:[#allocation5 + $0x10] sm:$0xff]
    %v145 = vld [vmem:[#allocation5 + $0x18] sm:$0xff]
    %v146 = vld [vmem:[#allocation5 + $0x20] sm:$0xff]
    %v147 = vld [vmem:[#allocation7 + $0x18] sm:$0xff]
    %v148 = vld [vmem:[#allocation7 + $0x20] sm:$0xff]
    %v149 = vld [vmem:[#allocation7 + $0x28] sm:$0xff]
    %v150 = vld [vmem:[#allocation7 + $0x30] sm:$0xff]
    %152 = vset.pattern.permute.xlu0 0
    %153 = vperm.xlu0 %152, %v147
    %v154 = vpop.permute.xlu0 %153
    %157 = vset.pattern.permute.xlu0 0
    %158 = vperm.xlu0 %157, %v148
    %v159 = vpop.permute.xlu0 %158
    %162 = vset.pattern.permute.xlu0 0
    %163 = vperm.xlu0 %162, %v149
    %v164 = vpop.permute.xlu0 %163
    %167 = vset.pattern.permute.xlu0 0
    %168 = vperm.xlu0 %167, %v150
    %v169 = vpop.permute.xlu0 %168
    %v172 = vsel %vm68, %v143, 0
    %v175 = vsel %vm68, %v144, 0
    %v178 = vsel %vm68, %v145, 0
    %v181 = vsel %vm68, %v146, 0
    %183 = vmatpush.msra.mxu0 0.0
    %184 = vmatpush.msra.mxu0 0.0
    %185 = vmatpush.msra.mxu0 0.0
    %186 = vmatpush.msra.mxu0 0.0
    %187 = vmatpush.msra.mxu0 0.0
    %188 = vmatpush.msra.mxu0 0.0
    %189 = vmatpush.msra.mxu0 0.0
    %190 = vmatpush.msra.mxu0 0.0
    %191 = vmatpush.msra.mxu0 0.0
    %192 = vmatpush.msra.mxu0 0.0
    %193 = vmatpush.msra.mxu0 0.0
    %194 = vmatpush.msra.mxu0 0.0
    %195 = vmatpush.msra.mxu0 0.0
    %196 = vmatpush.msra.mxu0 0.0
    %197 = vmatpush.msra.mxu0 0.0
    %198 = vmatpush.msra.mxu0 %v142
    %199 = vmatmul.f32.gmra.mxu0 %v172
    %v200 = vpop.f32.mrf.mxu0
    %v201 = vadd.f32 %v154, %v200
    %202 = vmatmul.f32.gmra.mxu0 %v175
    %v203 = vpop.f32.mrf.mxu0
    %v204 = vadd.f32 %v159, %v203
    %205 = vmatmul.f32.gmra.mxu0 %v178
    %v206 = vpop.f32.mrf.mxu0
    %v207 = vadd.f32 %v164, %v206
    %208 = vmatmul.f32.gmra.mxu0 %v181
    %v209 = vpop.f32.mrf.mxu0
    %v210 = vadd.f32 %v169, %v209
    %211 = vdwg.mxu0
    %v212 = vmax.f32 %v201, 0.0
    %v213 = vmax.f32 %v204, 0.0
    %v214 = vmax.f32 %v207, 0.0
    %v215 = vmax.f32 %v210, 0.0
    %v216 = vld [vmem:[#allocation5 + $0x28] sm:$0xff]
    %v217 = vld [vmem:[#allocation7 + $0x38] sm:$0xff]
    %219 = vset.pattern.permute.xlu0 0
    %220 = vperm.xlu0 %219, %v217
    %v221 = vpop.permute.xlu0 %220
    %vm223 = vcmask 261120
    %v225 = vsel %vm223, %v216, 0
    %227 = vmatpush.msra.mxu0 0.0
    %228 = vmatpush.msra.mxu0 0.0
    %229 = vmatpush.msra.mxu0 0.0
    %230 = vmatpush.msra.mxu0 0.0
    %231 = vmatpush.msra.mxu0 0.0
    %232 = vmatpush.msra.mxu0 0.0
    %233 = vmatpush.msra.mxu0 0.0
    %234 = vmatpush.msra.mxu0 0.0
    %235 = vmatpush.msra.mxu0 0.0
    %236 = vmatpush.msra.mxu0 0.0
    %237 = vmatpush.msra.mxu0 0.0
    %238 = vmatpush.msra.mxu0 0.0
    %239 = vmatpush.msra.mxu0 %v215
    %240 = vmatpush.msra.mxu0 %v214
    %241 = vmatpush.msra.mxu0 %v213
    %242 = vmatpush.msra.mxu0 %v212
    %243 = vmatmul.f32.gmra.mxu0 %v225
    %v244 = vpop.f32.mrf.mxu0
    %v245 = vadd.f32 %v221, %v244
    %246 = vdwg.mxu0
    %v247 = vadd.f32 %v142, %v245
    %v248 = vsel %vm68, %v247, 0.0
    %v249 = vrot.slane %v248, 4
    %v250 = vadd.f32 %v248, %v249
    %v251 = vrot.slane %v250, 2
    %v252 = vadd.f32 %v250, %v251
    %v253 = vrot.slane %v252, 1
    %v254 = vadd.f32 %v252, %v253
    %v255 = vmul.f32 %v254, %v107
    %v256 = vsub.f32 %v247, %v255
    %v257 = vmul.f32 %v256, %v256
    %v258 = vsel %vm68, %v257, 0.0
    %v259 = vrot.slane %v258, 4
    %v260 = vadd.f32 %v258, %v259
    %v261 = vrot.slane %v260, 2
    %v262 = vadd.f32 %v260, %v261
    %v263 = vrot.slane %v262, 1
    %v264 = vadd.f32 %v262, %v263
    %v265 = vmul.f32 %v264, %v107
    %v266 = vadd.f32 %v265, 1e-05
    %v267 = vrsqrt.pop %v266
    %v268 = vmul.f32 %v267, %v266
    %v269 = vmul.f32 %v268, %v267
    %v270 = vmul.f32 0.5, %v269
    %v271 = vsub.f32 1.5, %v270
    %v272 = vmul.f32 %v267, %v271
    %vm273 = vweird.f32 %v266
    %vm274 = vweird.f32 %v267
    %vm275 = vmor %vm273, %vm274
    %v276 = vsel %vm275, %v267, %v272
    %v277 = vmul.f32 %v256, %v276
    %v278 = vld [vmem:[#allocation5 + $0x30] sm:$0xff]
    %v279 = vld [vmem:[#allocation5 + $0x38] sm:$0xff]
    %v280 = vld [vmem:[#allocation5 + $0x40] sm:$0xff]
    %v281 = vld [vmem:[#allocation5 + $0x48] sm:$0xff]
    %v282 = vld [vmem:[#allocation5 + $0x50] sm:$0xff]
    %v283 = vld [vmem:[#allocation5 + $0x58] sm:$0xff]
    %v284 = vld [vmem:[#allocation5 + $0x60] sm:$0xff]
    %v285 = vld [vmem:[#allocation5 + $0x68] sm:$0xff]
    %v286 = vld [vmem:[#allocation7 + $0x40] sm:$0xff]
    %v287 = vld [vmem:[#allocation7 + $0x48] sm:$0xff]
    %v288 = vld [vmem:[#allocation7 + $0x50] sm:$0xff]
    %v289 = vld [vmem:[#allocation7 + $0x58] sm:$0xff]
    %v290 = vld [vmem:[#allocation7 + $0x60] sm:$0xff]
    %v291 = vld [vmem:[#allocation7 + $0x68] sm:$0xff]
    %v292 = vld [vmem:[#allocation7 + $0x70] sm:$0xff]
    %v293 = vld [vmem:[#allocation7 + $0x78] sm:$0xff]
    %295 = vset.pattern.permute.xlu0 0
    %296 = vperm.xlu0 %295, %v286
    %v297 = vpop.permute.xlu0 %296
    %300 = vset.pattern.permute.xlu0 0
    %301 = vperm.xlu0 %300, %v287
    %v302 = vpop.permute.xlu0 %301
    %305 = vset.pattern.permute.xlu0 0
    %306 = vperm.xlu0 %305, %v288
    %v307 = vpop.permute.xlu0 %306
    %310 = vset.pattern.permute.xlu0 0
    %311 = vperm.xlu0 %310, %v289
    %v312 = vpop.permute.xlu0 %311
    %315 = vset.pattern.permute.xlu0 0
    %316 = vperm.xlu0 %315, %v290
    %v317 = vpop.permute.xlu0 %316
    %320 = vset.pattern.permute.xlu0 0
    %321 = vperm.xlu0 %320, %v291
    %v322 = vpop.permute.xlu0 %321
    %325 = vset.pattern.permute.xlu0 0
    %326 = vperm.xlu0 %325, %v292
    %v327 = vpop.permute.xlu0 %326
    %330 = vset.pattern.permute.xlu0 0
    %331 = vperm.xlu0 %330, %v293
    %v332 = vpop.permute.xlu0 %331
    %v335 = vsel %vm68, %v278, 0
    %v338 = vsel %vm68, %v279, 0
    %v341 = vsel %vm68, %v280, 0
    %v344 = vsel %vm68, %v281, 0
    %v347 = vsel %vm68, %v282, 0
    %v350 = vsel %vm68, %v283, 0
    %v353 = vsel %vm68, %v284, 0
    %v356 = vsel %vm68, %v285, 0
    %358 = vmatpush.msra.mxu0 0.0
    %359 = vmatpush.msra.mxu0 0.0
    %360 = vmatpush.msra.mxu0 0.0
    %361 = vmatpush.msra.mxu0 0.0
    %362 = vmatpush.msra.mxu0 0.0
    %363 = vmatpush.msra.mxu0 0.0
    %364 = vmatpush.msra.mxu0 0.0
    %365 = vmatpush.msra.mxu0 0.0
    %366 = vmatpush.msra.mxu0 0.0
    %367 = vmatpush.msra.mxu0 0.0
    %368 = vmatpush.msra.mxu0 0.0
    %369 = vmatpush.msra.mxu0 0.0
    %370 = vmatpush.msra.mxu0 0.0
    %371 = vmatpush.msra.mxu0 0.0
    %372 = vmatpush.msra.mxu0 0.0
    %373 = vmatpush.msra.mxu0 %v277
    %374 = vmatmul.f32.gmra.mxu0 %v335
    %v375 = vpop.f32.mrf.mxu0
    %v376 = vadd.f32 %v297, %v375
    %377 = vmatmul.f32.gmra.mxu0 %v338
    %v378 = vpop.f32.mrf.mxu0
    %v379 = vadd.f32 %v302, %v378
    %380 = vmatmul.f32.gmra.mxu0 %v341
    %v381 = vpop.f32.mrf.mxu0
    %v382 = vadd.f32 %v307, %v381
    %383 = vmatmul.f32.gmra.mxu0 %v344
    %v384 = vpop.f32.mrf.mxu0
    %v385 = vadd.f32 %v312, %v384
    %386 = vmatmul.f32.gmra.mxu0 %v347
    %v387 = vpop.f32.mrf.mxu0
    %v388 = vadd.f32 %v317, %v387
    %389 = vmatmul.f32.gmra.mxu0 %v350
    %v390 = vpop.f32.mrf.mxu0
    %v391 = vadd.f32 %v322, %v390
    %392 = vmatmul.f32.gmra.mxu0 %v353
    %v393 = vpop.f32.mrf.mxu0
    %v394 = vadd.f32 %v327, %v393
    %395 = vmatmul.f32.gmra.mxu0 %v356
    %v396 = vpop.f32.mrf.mxu0
    %v397 = vadd.f32 %v332, %v396
    %398 = vdwg.mxu0
    %v399 = vmax.f32 %v376, 0.0
    %v400 = vmax.f32 %v379, 0.0
    %v401 = vmax.f32 %v382, 0.0
    %v402 = vmax.f32 %v385, 0.0
    %v403 = vmax.f32 %v388, 0.0
    %v404 = vmax.f32 %v391, 0.0
    %v405 = vmax.f32 %v394, 0.0
    %v406 = vmax.f32 %v397, 0.0
    %v407 = vld [vmem:[#allocation5 + $0x70] sm:$0xff]
    %v408 = vld [vmem:[#allocation5 + $0x78] sm:$0xff]
    %v409 = vld [vmem:[#allocation5 + $0x80] sm:$0xff]
    %v410 = vld [vmem:[#allocation5 + $0x88] sm:$0xff]
    %v411 = vld [vmem:[#allocation5 + $0x90] sm:$0xff]
    %v412 = vld [vmem:[#allocation5 + $0x98] sm:$0xff]
    %v413 = vld [vmem:[#allocation5 + $0xa0] sm:$0xff]
    %v414 = vld [vmem:[#allocation5 + $0xa8] sm:$0xff]
    %v415 = vld [vmem:[#allocation7 + $0x80] sm:$0xff]
    %v416 = vld [vmem:[#allocation7 + $0x88] sm:$0xff]
    %v417 = vld [vmem:[#allocation7 + $0x90] sm:$0xff]
    %v418 = vld [vmem:[#allocation7 + $0x98] sm:$0xff]
    %v419 = vld [vmem:[#allocation7 + $0xa0] sm:$0xff]
    %v420 = vld [vmem:[#allocation7 + $0xa8] sm:$0xff]
    %v421 = vld [vmem:[#allocation7 + $0xb0] sm:$0xff]
    %v422 = vld [vmem:[#allocation7 + $0xb8] sm:$0xff]
    %424 = vset.pattern.permute.xlu0 0
    %425 = vperm.xlu0 %424, %v415
    %v426 = vpop.permute.xlu0 %425
    %429 = vset.pattern.permute.xlu0 0
    %430 = vperm.xlu0 %429, %v416
    %v431 = vpop.permute.xlu0 %430
    %434 = vset.pattern.permute.xlu0 0
    %435 = vperm.xlu0 %434, %v417
    %v436 = vpop.permute.xlu0 %435
    %439 = vset.pattern.permute.xlu0 0
    %440 = vperm.xlu0 %439, %v418
    %v441 = vpop.permute.xlu0 %440
    %444 = vset.pattern.permute.xlu0 0
    %445 = vperm.xlu0 %444, %v419
    %v446 = vpop.permute.xlu0 %445
    %449 = vset.pattern.permute.xlu0 0
    %450 = vperm.xlu0 %449, %v420
    %v451 = vpop.permute.xlu0 %450
    %454 = vset.pattern.permute.xlu0 0
    %455 = vperm.xlu0 %454, %v421
    %v456 = vpop.permute.xlu0 %455
    %459 = vset.pattern.permute.xlu0 0
    %460 = vperm.xlu0 %459, %v422
    %v461 = vpop.permute.xlu0 %460
    %vm463 = vcmask 523264
    %v465 = vsel %vm463, %v407, 0
    %v468 = vsel %vm463, %v408, 0
    %v471 = vsel %vm463, %v409, 0
    %v474 = vsel %vm463, %v410, 0
    %v477 = vsel %vm463, %v411, 0
    %v480 = vsel %vm463, %v412, 0
    %v483 = vsel %vm463, %v413, 0
    %v486 = vsel %vm463, %v414, 0
    %488 = vmatpush.msra.mxu0 0.0
    %489 = vmatpush.msra.mxu0 0.0
    %490 = vmatpush.msra.mxu0 0.0
    %491 = vmatpush.msra.mxu0 0.0
    %492 = vmatpush.msra.mxu0 0.0
    %493 = vmatpush.msra.mxu0 0.0
    %494 = vmatpush.msra.mxu0 0.0
    %495 = vmatpush.msra.mxu0 0.0
    %496 = vmatpush.msra.mxu0 %v406
    %497 = vmatpush.msra.mxu0 %v405
    %498 = vmatpush.msra.mxu0 %v404
    %499 = vmatpush.msra.mxu0 %v403
    %500 = vmatpush.msra.mxu0 %v402
    %501 = vmatpush.msra.mxu0 %v401
    %502 = vmatpush.msra.mxu0 %v400
    %503 = vmatpush.msra.mxu0 %v399
    %504 = vmatmul.f32.gmra.mxu0 %v465
    %v505 = vpop.f32.mrf.mxu0
    %v506 = vadd.f32 %v426, %v505
    %507 = vmatmul.f32.gmra.mxu0 %v468
    %v508 = vpop.f32.mrf.mxu0
    %v509 = vadd.f32 %v431, %v508
    %510 = vmatmul.f32.gmra.mxu0 %v471
    %v511 = vpop.f32.mrf.mxu0
    %v512 = vadd.f32 %v436, %v511
    %513 = vmatmul.f32.gmra.mxu0 %v474
    %v514 = vpop.f32.mrf.mxu0
    %v515 = vadd.f32 %v441, %v514
    %516 = vmatmul.f32.gmra.mxu0 %v477
    %v517 = vpop.f32.mrf.mxu0
    %v518 = vadd.f32 %v446, %v517
    %519 = vmatmul.f32.gmra.mxu0 %v480
    %v520 = vpop.f32.mrf.mxu0
    %v521 = vadd.f32 %v451, %v520
    %522 = vmatmul.f32.gmra.mxu0 %v483
    %v523 = vpop.f32.mrf.mxu0
    %v524 = vadd.f32 %v456, %v523
    %525 = vmatmul.f32.gmra.mxu0 %v486
    %v526 = vpop.f32.mrf.mxu0
    %v527 = vadd.f32 %v461, %v526
    %528 = vdwg.mxu0
    %v529 = vmax.f32 %v506, 0.0
    %v530 = vmax.f32 %v509, 0.0
    %v531 = vmax.f32 %v512, 0.0
    %v532 = vmax.f32 %v515, 0.0
    %v533 = vmax.f32 %v518, 0.0
    %v534 = vmax.f32 %v521, 0.0
    %v535 = vmax.f32 %v524, 0.0
    %v536 = vmax.f32 %v527, 0.0
    %v537 = vld [vmem:[#allocation5 + $0xb0] sm:$0xff]
    %v538 = vld [vmem:[#allocation7 + $0xc0] sm:$0xff]
    %540 = vset.pattern.permute.xlu0 0
    %541 = vperm.xlu0 %540, %v538
    %v542 = vpop.permute.xlu0 %541
    %v545 = vsel %vm463, %v537, 0
    %547 = vmatpush.msra.mxu0 0.0
    %548 = vmatpush.msra.mxu0 0.0
    %549 = vmatpush.msra.mxu0 0.0
    %550 = vmatpush.msra.mxu0 0.0
    %551 = vmatpush.msra.mxu0 0.0
    %552 = vmatpush.msra.mxu0 0.0
    %553 = vmatpush.msra.mxu0 0.0
    %554 = vmatpush.msra.mxu0 0.0
    %555 = vmatpush.msra.mxu0 %v536
    %556 = vmatpush.msra.mxu0 %v535
    %557 = vmatpush.msra.mxu0 %v534
    %558 = vmatpush.msra.mxu0 %v533
    %559 = vmatpush.msra.mxu0 %v532
    %560 = vmatpush.msra.mxu0 %v531
    %561 = vmatpush.msra.mxu0 %v530
    %562 = vmatpush.msra.mxu0 %v529
    %563 = vmatmul.f32.gmra.mxu0 %v545
    %v564 = vpop.f32.mrf.mxu0
    %v565 = vadd.f32 %v542, %v564
    %566 = vdwg.mxu0
    %v567 = vmax.f32 %v565, -20.0
    %v568 = vmin.f32 %v567, 2.0
    %v569 = vmul.f32 %v568, 1.442695
    %v570 = vpow.pop %v569
    %v571 = vlaneseq
    %v572 = vshrl.u32 %v571, 7
    %vm573 = vcmp.ge.s32.totalorder %v572, 4
    %v574 = vsel %vm573, %v570, %v565
    %575 = vst.msk [vmem:[#allocation8] sm:$0xff] %vm68, %v574
    // Predicated region
    $region26: #{tpu_custom_call.1} parent=1 // pred_check
      _
    $region27: #{tpu_custom_call.1} parent=1 // pred_check_branch
      %577 = sbr.rel (0) target = $region29
    $region28: #{tpu_custom_call.1} parent=1 // pred_region
      %579 = vsyncadd [#allocation4], 0
      %s581 = sshll.u32 [#allocation8], 4
      %s582 = int_to_ptr.vmem [resolvable:$true] %s581
      %s583 = sshll.u32 %s3, 4
      %s584 = int_to_ptr.hbm [resolvable:$true] %s583
      %586 = dma.vmem_to_hbm [thread:$0]  %s582, 128, %s584, [#allocation4]
    $region29: #{tpu_custom_call.1} parent=1 // pred_fallthru
      _
    // Predicated region
    $region30: #{tpu_custom_call.1} parent=1 // pred_check
      _
    $region31: #{tpu_custom_call.1} parent=1 // pred_check_branch
      %588 = sbr.rel (0) target = $region33
    $region32: #{tpu_custom_call.1} parent=1 // pred_region
      %590 = dma.done [#allocation4], 128
    $region33: #{tpu_custom_call.1} parent=1 // pred_fallthru
      _
    %591 = vsyncpa [#allocation3], 1
    %592 = vsyncpa [#allocation6], 1
    %593 = vsyncpa [#allocation4], 1

</llo_original>
